<compile_context>
chip_gen: v5e
topology: v5e:2x2
jax: 0.10.0
libtpu: 0.0.40
codegen_flags: <defaults>
</compile_context>

<pallas_src>
import jax
import jax.numpy as jnp
from jax import lax
from jax.experimental import pallas as pl
from jax.experimental.pallas import tpu as pltpu

_EPS = 1e-12           # F.normalize default eps
_EPS_SQ = _EPS * _EPS  # rsqrt(max(s, eps^2)) == 1 / max(sqrt(s), eps)


def byol_loss_kernel(a_ref, b_ref, o_ref):
    # a_ref/b_ref: (TN, D) tiles; o_ref: (1, TN) lane-dense per-row losses.
    a = a_ref[...].astype(jnp.float32)
    b = b_ref[...].astype(jnp.float32)
    # TODO(synk): for bf16 inputs on v7x, convert per-D-chunk (or reduce via the
    # MXU against a ones vector) instead of materializing full f32 tiles.
    # One pass over the loaded tiles: the three products share the a/b vreg
    # loads, then reduce along lanes (XLU) into (TN,) vectors.
    dot = jnp.sum(a * b, axis=1)
    sa = jnp.sum(a * a, axis=1)
    sb = jnp.sum(b * b, axis=1)
    inv = lax.rsqrt(jnp.maximum(sa, _EPS_SQ)) * lax.rsqrt(jnp.maximum(sb, _EPS_SQ))
    res = 2.0 - 2.0 * dot * inv                       # (TN,)
    o_ref[...] = res[None, :].astype(o_ref.dtype)     # lane-dense (1, TN) store


def _cdiv(a, b):
    return (a + b - 1) // b


def _round_up(x, m):
    return ((x + m - 1) // m) * m


def _round_down(x, m):
    return (x // m) * m


def _sublane(dtype):
    return 16 if jnp.dtype(dtype).itemsize == 2 else 8


def _vmem_capacity_bytes():
    try:
        return int(pltpu.get_tpu_info().vmem_capacity_bytes)
    except Exception:
        return 64 << 20  # conservative (v7x-sized) fallback


def _pick_block_n(N, D, dtype, budget_bytes, buffers):
    """Largest sublane-aligned row tile within the VMEM budget, targeting >= ~4
    grid steps (pipelining / megacore) and >= ~1 MiB of input per tile."""
    itemsize = jnp.dtype(dtype).itemsize
    sublane = _sublane(dtype)
    row_bytes = D * itemsize

    bn_cap = int(budget_bytes // (2 * buffers * row_bytes))
    bn_cap = max(min(bn_cap, 4096), sublane)
    bn_cap = max(_round_down(bn_cap, sublane), sublane)

    if N <= sublane:
        return N  # single tile; block must equal the full dim for tiny N anyway

    bn_floor = _round_up(max((1 << 20) // row_bytes, 1), sublane)  # ~1 MiB/tile
    bn_floor = min(bn_floor, bn_cap)
    bn_steps = max(_round_down(N // 4, sublane), sublane)          # >= ~4 steps
    bn = max(bn_floor, min(bn_cap, bn_steps))
    if bn >= N:
        return N
    return bn


def _run_pallas(a, b, block_n, buffers, vmem_limit):
    N, D = a.shape
    num_tiles = _cdiv(N, block_n)
    itemsize = jnp.dtype(a.dtype).itemsize

    def _in_spec():
        if buffers > 2:
            try:  # deeper input pipeline on big-VMEM chips (v5e/v6e)
                return pl.BlockSpec((block_n, D), lambda i: (i, 0),
                                    pipeline_mode=pl.Buffered(buffers))
            except Exception:
                pass
        return pl.BlockSpec((block_n, D), lambda i: (i, 0))

    cost = pl.CostEstimate(
        flops=6 * N * D,
        bytes_accessed=2 * N * D * itemsize + 4 * num_tiles * block_n,
        transcendentals=2 * N,
    )

    return pl.pallas_call(
        byol_loss_kernel,
        out_shape=jax.ShapeDtypeStruct((num_tiles, block_n), jnp.float32),
        grid=(num_tiles,),
        in_specs=[_in_spec(), _in_spec()],
        out_specs=pl.BlockSpec((1, block_n), lambda i: (i, 0)),
        compiler_params=pltpu.CompilerParams(
            dimension_semantics=("parallel",),
            vmem_limit_bytes=vmem_limit,
        ),
        cost_estimate=cost,
    )(a, b)


def byol_loss(a, b, reduction: str = "none", block_n: int | None = None):
    """Pallas TPU BYOL loss. a, b: (N, D) float arrays (f32 or bf16)."""
    assert a.shape == b.shape and a.ndim == 2
    N, D = a.shape
    itemsize = jnp.dtype(a.dtype).itemsize
    sublane = _sublane(a.dtype)

    vmem_cap = _vmem_capacity_bytes()
    big_vmem = vmem_cap >= (100 << 20)      # v5e / v6e: 128 MiB physical VMEM
    buffers = 3 if big_vmem else 2          # keep 2-deep on 64-MiB v7x
    budget = (48 << 20) if big_vmem else (24 << 20)

    if block_n is None:
        block_n = _pick_block_n(N, D, a.dtype, budget, buffers)
        # v7x: nudge the "parallel" axis to an even step count so both
        # TensorCores get equal work (harmless on single-TC v5e/v6e).
        steps = _cdiv(N, block_n)
        if steps >= 4 and steps % 2 == 1:
            bn2 = _round_up(_cdiv(N, steps + 1), sublane)
            if bn2 >= sublane and _cdiv(N, bn2) % 2 == 0:
                block_n = bn2
    block_n = min(block_n, N)
    num_tiles = _cdiv(N, block_n)

    # VMEM accounting: multi-buffered input tiles + sublane-padded (1, block_n)
    # output buffers + slack; capped per generation.
    in_bytes = 2 * buffers * block_n * D * itemsize
    out_bytes = 2 * 8 * block_n * 4
    cap = (96 << 20) if big_vmem else (48 << 20)
    vmem_limit = int(min(max(in_bytes + out_bytes + (8 << 20), 24 << 20), cap))

    try:
        out2d = _run_pallas(a, b, block_n, buffers, vmem_limit)
    except Exception:
        if buffers > 2:  # fall back to the default 2-deep pipeline
            out2d = _run_pallas(a, b, block_n, 2, vmem_limit)
        else:
            raise

    out = out2d.reshape(-1)[:N]  # drop padded rows of the last (partial) tile
    if reduction == "none":
        return out
    elif reduction == "sum":
        return out.sum()
    elif reduction == "mean":
        return out.mean()
    else:
        raise ValueError(reduction)
    # TODO(synk): for reduction != 'none', a (1,1) in-kernel accumulator over an
    # "arbitrary" grid axis would avoid the tiny follow-up XLA reduction.


def _reference(a, b):
    a32 = a.astype(jnp.float32)
    b32 = b.astype(jnp.float32)
    na = jnp.maximum(jnp.linalg.norm(a32, axis=1, keepdims=True), _EPS)
    nb = jnp.maximum(jnp.linalg.norm(b32, axis=1, keepdims=True), _EPS)
    return 2.0 - 2.0 * jnp.sum((a32 / na) * (b32 / nb), axis=1)


if __name__ == "__main__":
    key = jax.random.PRNGKey(0)
    ka, kb, kc, kd, ke, kf = jax.random.split(key, 6)

    # Small BYOL-style projector outputs.
    N, D = 8, 128
    a = jax.random.normal(ka, (N, D), jnp.float32)
    b = jax.random.normal(kb, (N, D), jnp.float32)
    out = jax.block_until_ready(byol_loss(a, b, reduction="none"))
    ref = _reference(a, b)
    assert out.shape == (N,)
    assert jnp.allclose(out, ref, atol=1e-5, rtol=1e-5), (out, ref)

    # Non-multiple-of-8 batch + forced small tile (multi-step grid, partial tile,
    # lane-dense multi-row output writeback).
    N2, D2 = 20, 256
    a2 = jax.random.normal(kc, (N2, D2), jnp.float32)
    b2 = jax.random.normal(kd, (N2, D2), jnp.float32)
    out2 = jax.block_until_ready(byol_loss(a2, b2, reduction="mean", block_n=8))
    ref2 = _reference(a2, b2).mean()
    assert jnp.allclose(out2, ref2, atol=1e-5, rtol=1e-5), (out2, ref2)

    # D not a multiple of 128 (lane padding must be masked in the reductions),
    # bf16 inputs.
    N3, D3 = 24, 200
    a3 = jax.random.normal(ke, (N3, D3), jnp.float32).astype(jnp.bfloat16)
    b3 = jax.random.normal(kf, (N3, D3), jnp.float32).astype(jnp.bfloat16)
    out3 = jax.block_until_ready(byol_loss(a3, b3, reduction="sum"))
    ref3 = _reference(a3, b3).sum()
    assert jnp.allclose(out3, ref3, atol=5e-3, rtol=5e-3), (out3, ref3)

    print("KERNEL_OK")
</pallas_src>

<mosaic_0001>
module attributes {stable_mosaic.version = 11 : i64} {
  func.func @byol_loss_kernel(%arg0: i32, %arg1: memref<8x128xf32, #tpu.memory_space<vmem>>, %arg2: memref<8x128xf32, #tpu.memory_space<vmem>>, %arg3: memref<1x8xf32, #tpu.memory_space<vmem>>) attributes {dimension_semantics = [#tpu.dimension_semantics<parallel>], iteration_bounds = array<i64: 1>, scalar_prefetch = 0 : i64, scratch_operands = 0 : i64, tpu.core_type = #tpu.core_type<tc>, window_params = [{transform_indices = @transform_0, window_bounds = array<i64: 8, 128>}, {transform_indices = @transform_1, window_bounds = array<i64: 8, 128>}, {transform_indices = @transform_2, window_bounds = array<i64: 1, 8>}]} {
    %c0 = arith.constant 0 : index
    %c0_0 = arith.constant 0 : index
    %0 = vector.load %arg1[%c0, %c0_0] : memref<8x128xf32, #tpu.memory_space<vmem>>, vector<8x128xf32>
    %c0_1 = arith.constant 0 : index
    %c0_2 = arith.constant 0 : index
    %1 = vector.load %arg2[%c0_1, %c0_2] : memref<8x128xf32, #tpu.memory_space<vmem>>, vector<8x128xf32>
    %2 = arith.mulf %0, %1 : vector<8x128xf32>
    %cst = arith.constant dense<0.000000e+00> : vector<8xf32>
    %3 = vector.multi_reduction <add>, %2, %cst [1] : vector<8x128xf32> to vector<8xf32>
    %4 = arith.mulf %0, %0 : vector<8x128xf32>
    %cst_3 = arith.constant dense<0.000000e+00> : vector<8xf32>
    %5 = vector.multi_reduction <add>, %4, %cst_3 [1] : vector<8x128xf32> to vector<8xf32>
    %6 = arith.mulf %1, %1 : vector<8x128xf32>
    %cst_4 = arith.constant dense<0.000000e+00> : vector<8xf32>
    %7 = vector.multi_reduction <add>, %6, %cst_4 [1] : vector<8x128xf32> to vector<8xf32>
    %cst_5 = arith.constant 1.000000e-24 : f32
    %8 = vector.broadcast %cst_5 : f32 to vector<8xf32>
    %9 = arith.maximumf %5, %8 : vector<8xf32>
    %10 = math.rsqrt %9 : vector<8xf32>
    %cst_6 = arith.constant 1.000000e-24 : f32
    %11 = vector.broadcast %cst_6 : f32 to vector<8xf32>
    %12 = arith.maximumf %7, %11 : vector<8xf32>
    %13 = math.rsqrt %12 : vector<8xf32>
    %14 = arith.mulf %10, %13 : vector<8xf32>
    %cst_7 = arith.constant 2.000000e+00 : f32
    %15 = vector.broadcast %cst_7 : f32 to vector<8xf32>
    %16 = arith.mulf %15, %3 : vector<8xf32>
    %17 = arith.mulf %16, %14 : vector<8xf32>
    %cst_8 = arith.constant 2.000000e+00 : f32
    %18 = vector.broadcast %cst_8 : f32 to vector<8xf32>
    %19 = arith.subf %18, %17 : vector<8xf32>
    %20 = vector.shape_cast %19 : vector<8xf32> to vector<1x8xf32>
    %c0_9 = arith.constant 0 : index
    %c0_10 = arith.constant 0 : index
    %21 = vector.load %arg3[%c0_9, %c0_10] : memref<1x8xf32, #tpu.memory_space<vmem>>, vector<1x8xf32>
    tpu.vector_store %arg3[%c0_9, %c0_10], %20 {strides = array<i32>} : memref<1x8xf32, #tpu.memory_space<vmem>>, vector<1x8xf32>,
    return
  }
  func.func @transform_0(%arg0: i32) -> (i32, i32) {
    %c0_i32 = arith.constant 0 : i32
    %c0_i32_0 = arith.constant 0 : i32
    return %arg0, %c0_i32 : i32, i32
  }
  func.func @transform_1(%arg0: i32) -> (i32, i32) {
    %c0_i32 = arith.constant 0 : i32
    %c0_i32_0 = arith.constant 0 : i32
    return %arg0, %c0_i32 : i32, i32
  }
  func.func @transform_2(%arg0: i32) -> (i32, i32) {
    %c0_i32 = arith.constant 0 : i32
    %c0_i32_0 = arith.constant 0 : i32
    return %arg0, %c0_i32 : i32, i32
  }
}

</mosaic_0001>

<llo_original>
// kernel: tpu_custom_call.1
$region0: #{tpu_custom_call.1}
  #allocation0 [shape = 'u32[]', space=smem, size = 0x4, offset = 0x4, fixed_abs, tag = 'smem constant byte address 0x4 - core index']
  #allocation1 [shape = 'u32[72,128]{1,0:T(1,128)}', space=vmem, size = 0x9000, scoped, tag = 'internal scratch']
  %s0 = inlined_call_operand.hbm [shape: f32[8,128], index: 0, kind: input, shape index: {}]
  %s1 = inlined_call_operand.hbm [shape: f32[8,128], index: 1, kind: input, shape index: {}]
  %s2 = inlined_call_operand.hbm [shape: f32[1,8], index: 2, kind: output, shape index: {}]
  %s3 = sld [smem:[#allocation0]]
  $region26: #{tpu_custom_call.1} parent=0
    _
  %s5 = ssub.s32 1, %s3
  %s6 = scalar_select 0, %s5, %s3
  $region1: #{tpu_custom_call.1} parent=0
    #allocation2 [shape = 'u8[4096]{0}', space=vmem, size = 0x1000, scoped, tag = 'input window, operand 0, single buffered']
    #allocation3 [shape = 's32[1]{0}', space=sflag, size = 0x4, scoped, tag = 'scoped memory for tpu_custom_call.1']
    #allocation4 [shape = 's32[1]{0}', space=sflag, size = 0x4, scoped, tag = 'scoped memory for tpu_custom_call.1']
    #allocation5 [shape = 'u8[4096]{0}', space=vmem, size = 0x1000, scoped, tag = 'input window, operand 1, single buffered']
    #allocation6 [shape = 's32[1]{0}', space=sflag, size = 0x4, scoped, tag = 'scoped memory for tpu_custom_call.1']
    #allocation7 [shape = 'u8[512]{0}', space=vmem, size = 0x400, scoped, tag = 'output window, operand 0, single buffered']
    %7 = vsyncpa [#allocation3], 0
    %8 = vsyncpa [#allocation6], 0
    %9 = vsyncpa [#allocation4], 0
    // Predicated region
    $region2: #{tpu_custom_call.1} parent=1 // pred_check
      _
    $region3: #{tpu_custom_call.1} parent=1 // pred_check_branch
      %11 = sbr.rel (0) target = $region5
    $region4: #{tpu_custom_call.1} parent=1 // pred_region
      %13 = vsyncadd [#allocation3], 0
      %s15 = sshll.u32 %s0, 4
      %s16 = int_to_ptr.hbm [resolvable:$true] %s15
      %s17 = sshll.u32 [#allocation2], 4
      %s18 = int_to_ptr.vmem [resolvable:$true] %s17
      %20 = dma.hbm_to_vmem [thread:$0]  %s16, 128, %s18, [#allocation3]
    $region5: #{tpu_custom_call.1} parent=1 // pred_fallthru
      _
    // Predicated region
    $region6: #{tpu_custom_call.1} parent=1 // pred_check
      _
    $region7: #{tpu_custom_call.1} parent=1 // pred_check_branch
      %22 = sbr.rel (0) target = $region9
    $region8: #{tpu_custom_call.1} parent=1 // pred_region
      %24 = vsyncadd [#allocation6], 0
      %s26 = sshll.u32 %s1, 4
      %s27 = int_to_ptr.hbm [resolvable:$true] %s26
      %s28 = sshll.u32 [#allocation5], 4
      %s29 = int_to_ptr.vmem [resolvable:$true] %s28
      %31 = dma.hbm_to_vmem [thread:$0]  %s27, 128, %s29, [#allocation6]
    $region9: #{tpu_custom_call.1} parent=1 // pred_fallthru
      _
    // Predicated region
    $region10: #{tpu_custom_call.1} parent=1 // pred_check
      _
    $region11: #{tpu_custom_call.1} parent=1 // pred_check_branch
      %33 = sbr.rel (0) target = $region13
    $region12: #{tpu_custom_call.1} parent=1 // pred_region
      %35 = dma.done [#allocation3], 128
    $region13: #{tpu_custom_call.1} parent=1 // pred_fallthru
      _
    // Predicated region
    $region14: #{tpu_custom_call.1} parent=1 // pred_check
      _
    $region15: #{tpu_custom_call.1} parent=1 // pred_check_branch
      %37 = sbr.rel (0) target = $region17
    $region16: #{tpu_custom_call.1} parent=1 // pred_region
      %39 = dma.done [#allocation6], 128
    $region17: #{tpu_custom_call.1} parent=1 // pred_fallthru
      _
    %v40 = vld [vmem:[#allocation2] sm:$0xff]
    %v41 = vld [vmem:[#allocation5] sm:$0xff]
    %v42 = vmul.f32 %v40, %v41
    %43 = vadd.xlane.f32.xlu0 %v42
    %v44 = vpop.xlane.xlu0 %43
    %v45 = vmul.f32 %v40, %v40
    %46 = vadd.xlane.f32.xlu0 %v45
    %v47 = vpop.xlane.xlu0 %46
    %v48 = vmul.f32 %v41, %v41
    %49 = vadd.xlane.f32.xlu0 %v48
    %v50 = vpop.xlane.xlu0 %49
    %v51 = vmax.f32 %v47, 1e-24
    %v52 = vrsqrt.pop %v51
    %v53 = vmul.f32 %v52, %v51
    %v54 = vmul.f32 %v53, %v52
    %v55 = vmul.f32 0.5, %v54
    %v56 = vsub.f32 1.5, %v55
    %v57 = vmul.f32 %v52, %v56
    %vm58 = vweird.f32 %v51
    %vm59 = vweird.f32 %v52
    %vm60 = vmor %vm58, %vm59
    %v61 = vsel %vm60, %v52, %v57
    %v62 = vmax.f32 %v50, 1e-24
    %v63 = vrsqrt.pop %v62
    %v64 = vmul.f32 %v63, %v62
    %v65 = vmul.f32 %v64, %v63
    %v66 = vmul.f32 0.5, %v65
    %v67 = vsub.f32 1.5, %v66
    %v68 = vmul.f32 %v63, %v67
    %vm69 = vweird.f32 %v62
    %vm70 = vweird.f32 %v63
    %vm71 = vmor %vm69, %vm70
    %v72 = vsel %vm71, %v63, %v68
    %v73 = vmul.f32 %v61, %v72
    %v74 = vmul.f32 %v44, 2.0
    %v75 = vmul.f32 %v74, %v73
    %v76 = vsub.f32 2.0, %v75
    %v78 = vlaneseq
    %v79 = vand.u32 %v78, 127
    %v80 = vperm.slane %v76, %v79
    %vm82 = vcmask 57344
    %83 = vst.msk [vmem:[#allocation7] sm:$0x1] %vm82, %v80
    // Predicated region
    $region18: #{tpu_custom_call.1} parent=1 // pred_check
      _
    $region19: #{tpu_custom_call.1} parent=1 // pred_check_branch
      %85 = sbr.rel (0) target = $region21
    $region20: #{tpu_custom_call.1} parent=1 // pred_region
      %87 = vsyncadd [#allocation4], 0
      %s89 = sshll.u32 [#allocation7], 4
      %s90 = int_to_ptr.vmem [resolvable:$true] %s89
      %s91 = sshll.u32 %s2, 4
      %s92 = int_to_ptr.hbm [resolvable:$true] %s91
      %94 = dma.vmem_to_hbm [thread:$0]  %s90, 16, %s92, [#allocation4]
    $region21: #{tpu_custom_call.1} parent=1 // pred_fallthru
      _
    // Predicated region
    $region22: #{tpu_custom_call.1} parent=1 // pred_check
      _
    $region23: #{tpu_custom_call.1} parent=1 // pred_check_branch
      %96 = sbr.rel (0) target = $region25
    $region24: #{tpu_custom_call.1} parent=1 // pred_region
      %98 = dma.done [#allocation4], 16
    $region25: #{tpu_custom_call.1} parent=1 // pred_fallthru
      _
    %99 = vsyncpa [#allocation3], 1
    %100 = vsyncpa [#allocation6], 1
    %101 = vsyncpa [#allocation4], 1

</llo_original>
